<compile_context>
chip_gen: v5e
topology: v5e:2x2
jax: 0.10.0
libtpu: 0.0.40
codegen_flags: <defaults>
</compile_context>

<pallas_src>
import math
from functools import lru_cache

import jax
import jax.numpy as jnp
from jax.experimental import pallas as pl
from jax.experimental.pallas import tpu as pltpu


def _copy_kernel(x_ref, o_ref):
    # Pure elementwise identity: a view carries every element through unchanged.
    o_ref[...] = x_ref[...]


def _resolve_shape(numel, shape):
    """Resolve a torch-style view shape (may contain a single -1)."""
    shape = list(shape)
    neg = [i for i, s in enumerate(shape) if s == -1]
    if len(neg) > 1:
        raise ValueError("only one -1 allowed in view shape")
    if neg:
        known = math.prod(s for s in shape if s != -1)
        if known == 0:
            if numel != 0:
                raise ValueError(f"cannot view {numel} elements as {shape}")
            shape[neg[0]] = 0
        else:
            if numel % known != 0:
                raise ValueError(f"cannot view {numel} elements as {shape}")
            shape[neg[0]] = numel // known
    if math.prod(shape) != numel:
        raise ValueError(f"cannot view {numel} elements as {shape}")
    return tuple(shape)


# Lane-dense flattening candidates (all multiples of 128, widest first).
_LANE_CANDIDATES = (1024, 512, 256, 128)


@lru_cache(maxsize=None)
def _hw_config():
    """Per-generation block budget / VMEM limit / TensorCore count."""
    kind = ""
    try:
        kind = jax.devices()[0].device_kind.lower()
    except Exception:  # pragma: no cover - defensive (interpret mode, etc.)
        pass
    if "v5e" in kind or "v5 lite" in kind or "v5lite" in kind:
        # 16 MiB default scoped VMEM; 3 MiB blocks (12 MiB double-buffered) +
        # explicit raise to 32 MiB.  0.82 TB/s HBM hides step overhead anyway.
        return {"block_bytes": 3 << 20, "vmem_limit": 32 << 20, "num_cores": 1}
    if "v7" in kind:
        # 64 MiB *physical* VMEM per TC: 4 MiB blocks (16 MiB double-buffered),
        # explicit 44 MiB scoped limit -- never assume 128 MiB here.
        return {"block_bytes": 4 << 20, "vmem_limit": 44 << 20, "num_cores": 2}
    if "v6" in kind:
        return {"block_bytes": 4 << 20, "vmem_limit": 48 << 20, "num_cores": 1}
    if "v5p" in kind or "v4" in kind:
        # Megacore generations: 2 TensorCores share the grid.
        return {"block_bytes": 4 << 20, "vmem_limit": 48 << 20, "num_cores": 2}
    # Unknown backend: conservative.
    return {"block_bytes": 2 << 20, "vmem_limit": 32 << 20, "num_cores": 1}


def _round_up(v, unit):
    return ((v + unit - 1) // unit) * unit


def pallas_view(x, shape, *, block_bytes=None, donate=False):
    """Equivalent of torch.Tensor.view(*shape) with the data pass in Pallas.

    donate=True aliases the output onto the input buffer (only a win when the
    caller no longer needs x; otherwise XLA inserts a defensive copy that
    doubles HBM traffic, so it defaults to False).
    """
    numel = x.size
    out_shape = _resolve_shape(numel, shape)

    if numel == 0:
        # Zero-element tensors: metadata-only reshape (kernel path is moot).
        return jnp.reshape(x, out_shape)

    # Widest lane (multiple of 128) that exactly divides numel.
    lane = next((l for l in _LANE_CANDIDATES if numel % l == 0), None)
    if lane is None:
        # TODO(synk): ragged sizes (numel % 128 != 0) skip the kernel path and
        # use the metadata-only reshape directly (still exactly view-correct).
        return jnp.reshape(x, out_shape)

    cfg = _hw_config()
    if block_bytes is None:
        block_bytes = cfg["block_bytes"]
    num_cores = cfg["num_cores"]

    rows = numel // lane
    x2d = jnp.reshape(x, (rows, lane))

    itemsize = jnp.dtype(x.dtype).itemsize
    # Native sublane tile per dtype: 8 (f32), 16 (bf16/f16), 32 (int8/fp8).
    sub_unit = max(8, 32 // max(itemsize, 1))

    # Block budget in rows, rounded down to the dtype sublane unit.
    max_tile_rows = max(sub_unit, block_bytes // (lane * itemsize))
    max_tile_rows = (max_tile_rows // sub_unit) * sub_unit

    if rows <= max_tile_rows:
        # Full-extent sublane dim: always a legal block, single grid step.
        tile_rows = rows
        if num_cores > 1 and rows > sub_unit:
            # Keep both TensorCores fed: aim for >= 2 blocks per core.
            t = _round_up(pl.cdiv(rows, 2 * num_cores), sub_unit)
            tile_rows = min(t, rows)
    else:
        # Multiple of the sublane unit (>= 8); last block may be partial,
        # Pallas clips the boundary writeback.
        tile_rows = max_tile_rows
        if num_cores > 1:
            t = _round_up(pl.cdiv(rows, 2 * num_cores), sub_unit)
            tile_rows = min(tile_rows, max(t, sub_unit))

    grid = (pl.cdiv(rows, tile_rows),)

    y2d = pl.pallas_call(
        _copy_kernel,
        out_shape=jax.ShapeDtypeStruct((rows, lane), x.dtype),
        grid_spec=pltpu.PrefetchScalarGridSpec(
            num_scalar_prefetch=0,
            grid=grid,
            in_specs=[pl.BlockSpec((tile_rows, lane), lambda i: (i, 0))],
            out_specs=pl.BlockSpec((tile_rows, lane), lambda i: (i, 0)),
        ),
        # Opt-in aliasing: only profitable when the input buffer is dead.
        input_output_aliases=({0: 0} if donate else {}),
        # Declare a pure memory-bound op (0 flops, read N + write N bytes) so
        # XLA's scheduler can overlap it with neighboring compute.
        cost_estimate=pl.CostEstimate(
            flops=0,
            transcendentals=0,
            bytes_accessed=2 * numel * itemsize,
        ),
        compiler_params=pltpu.CompilerParams(
            dimension_semantics=("parallel",),
            vmem_limit_bytes=cfg["vmem_limit"],
        ),
    )(x2d)

    # Metadata-only reshape to the requested view shape (no data movement).
    return jnp.reshape(y2d, out_shape)


class View:
    """JAX/Pallas counterpart of the PyTorch View module."""

    def __init__(self, shape, donate=False):
        self.shape = tuple(shape)
        self.donate = donate

    def __call__(self, x):
        return pallas_view(x, self.shape, donate=self.donate)


if __name__ == "__main__":
    key = jax.random.PRNGKey(0)
    # NCHW-style input, as a PyTorch conv feature map would be: (2, 4, 16, 16)
    x = jax.random.normal(key, (2, 4, 16, 16), dtype=jnp.float32)

    # Typical use: flatten spatial+channel dims before a linear layer.
    view = View((2, -1))            # -> (2, 1024)
    y = jax.block_until_ready(view(x))
    ref = jnp.reshape(x, (2, -1))
    assert y.shape == (2, 1024), y.shape
    assert y.dtype == x.dtype
    assert bool(jnp.array_equal(y, ref))

    # A second view shape to exercise the resolver (back to 4-D).
    view2 = View((4, 2, 16, 16))
    z = jax.block_until_ready(view2(x))
    assert z.shape == (4, 2, 16, 16)
    assert bool(jnp.array_equal(z, jnp.reshape(x, (4, 2, 16, 16))))

    # bf16 path: exercises the dtype-aware sublane unit (16 rows / vreg).
    xb = x.astype(jnp.bfloat16)
    yb = jax.block_until_ready(View((8, -1))(xb))
    assert yb.shape == (8, 256)
    assert yb.dtype == jnp.bfloat16
    assert bool(jnp.array_equal(yb, jnp.reshape(xb, (8, -1))))

    # Multi-step grid with a partial last block (tiny block budget to force
    # rows=15, tile_rows<=8, grid>=2 on a small tensor).
    x3 = jax.random.normal(jax.random.PRNGKey(0), (5, 3, 16, 16), dtype=jnp.float32)
    y3 = jax.block_until_ready(pallas_view(x3, (15, 256), block_bytes=8 * 256 * 4))
    assert y3.shape == (15, 256)
    assert bool(jnp.array_equal(y3, jnp.reshape(x3, (15, 256))))

    # Opt-in donation path (aliased output) stays correct.
    x4 = jax.random.normal(jax.random.PRNGKey(1), (2, 4, 16, 16), dtype=jnp.float32)
    y4 = jax.block_until_ready(pallas_view(x4, (128, 16), donate=True))
    assert y4.shape == (128, 16)
    assert bool(jnp.array_equal(y4, jnp.reshape(x4, (128, 16))))

    # Zero-element tensor with -1 in the target shape (resolver guard).
    x0 = jnp.zeros((0, 16), dtype=jnp.float32)
    y0 = jax.block_until_ready(pallas_view(x0, (-1, 4)))
    assert y0.shape == (0, 4)

    print("KERNEL_OK")
</pallas_src>

<mosaic_0001>
module attributes {stable_mosaic.version = 11 : i64} {
  func.func @_copy_kernel(%arg0: i32, %arg1: memref<2x1024xf32, #tpu.memory_space<vmem>>, %arg2: memref<2x1024xf32, #tpu.memory_space<vmem>>) attributes {dimension_semantics = [#tpu.dimension_semantics<parallel>], iteration_bounds = array<i64: 1>, scalar_prefetch = 0 : i64, scratch_operands = 0 : i64, tpu.core_type = #tpu.core_type<tc>, window_params = [{transform_indices = @transform_0, window_bounds = array<i64: 2, 1024>}, {transform_indices = @transform_1, window_bounds = array<i64: 2, 1024>}]} {
    %c0 = arith.constant 0 : index
    %c0_0 = arith.constant 0 : index
    %0 = vector.load %arg1[%c0, %c0_0] : memref<2x1024xf32, #tpu.memory_space<vmem>>, vector<2x1024xf32>
    %c0_1 = arith.constant 0 : index
    %c0_2 = arith.constant 0 : index
    %1 = vector.load %arg2[%c0_1, %c0_2] : memref<2x1024xf32, #tpu.memory_space<vmem>>, vector<2x1024xf32>
    tpu.vector_store %arg2[%c0_1, %c0_2], %0 {strides = array<i32>} : memref<2x1024xf32, #tpu.memory_space<vmem>>, vector<2x1024xf32>,
    return
  }
  func.func @transform_0(%arg0: i32) -> (i32, i32) {
    %c0_i32 = arith.constant 0 : i32
    %c0_i32_0 = arith.constant 0 : i32
    return %arg0, %c0_i32 : i32, i32
  }
  func.func @transform_1(%arg0: i32) -> (i32, i32) {
    %c0_i32 = arith.constant 0 : i32
    %c0_i32_0 = arith.constant 0 : i32
    return %arg0, %c0_i32 : i32, i32
  }
}

</mosaic_0001>

<llo_original>
// kernel: tpu_custom_call.1
$region0: #{tpu_custom_call.1}
  #allocation0 [shape = 'u32[]', space=smem, size = 0x4, offset = 0x4, fixed_abs, tag = 'smem constant byte address 0x4 - core index']
  #allocation1 [shape = 'u32[72,128]{1,0:T(1,128)}', space=vmem, size = 0x9000, scoped, tag = 'internal scratch']
  %s0 = inlined_call_operand.hbm [shape: f32[2,1024], index: 0, kind: input, shape index: {}]
  %s1 = inlined_call_operand.hbm [shape: f32[2,1024], index: 1, kind: output, shape index: {}]
  %s2 = sld [smem:[#allocation0]]
  $region18: #{tpu_custom_call.1} parent=0
    _
  %s4 = ssub.s32 1, %s2
  %s5 = scalar_select 0, %s4, %s2
  $region1: #{tpu_custom_call.1} parent=0
    #allocation2 [shape = 'u8[8192]{0}', space=vmem, size = 0x2000, scoped, tag = 'input window, operand 0, single buffered']
    #allocation3 [shape = 's32[1]{0}', space=sflag, size = 0x4, scoped, tag = 'scoped memory for tpu_custom_call.1']
    #allocation4 [shape = 's32[1]{0}', space=sflag, size = 0x4, scoped, tag = 'scoped memory for tpu_custom_call.1']
    #allocation5 [shape = 'u8[8192]{0}', space=vmem, size = 0x2000, scoped, tag = 'output window, operand 0, single buffered']
    %6 = vsyncpa [#allocation3], 0
    %7 = vsyncpa [#allocation4], 0
    // Predicated region
    $region2: #{tpu_custom_call.1} parent=1 // pred_check
      _
    $region3: #{tpu_custom_call.1} parent=1 // pred_check_branch
      %9 = sbr.rel (0) target = $region5
    $region4: #{tpu_custom_call.1} parent=1 // pred_region
      %11 = vsyncadd [#allocation3], 0
      %s13 = sshll.u32 %s0, 4
      %s14 = int_to_ptr.hbm [resolvable:$true] %s13
      %s15 = sshll.u32 [#allocation2], 4
      %s16 = int_to_ptr.vmem [resolvable:$true] %s15
      %18 = dma.hbm_to_vmem [thread:$0]  %s14, 256, %s16, [#allocation3]
    $region5: #{tpu_custom_call.1} parent=1 // pred_fallthru
      _
    // Predicated region
    $region6: #{tpu_custom_call.1} parent=1 // pred_check
      _
    $region7: #{tpu_custom_call.1} parent=1 // pred_check_branch
      %20 = sbr.rel (0) target = $region9
    $region8: #{tpu_custom_call.1} parent=1 // pred_region
      %22 = dma.done [#allocation3], 256
    $region9: #{tpu_custom_call.1} parent=1 // pred_fallthru
      _
    %v23 = vld [vmem:[#allocation2] sm:$0xff]
    %v24 = vld [vmem:[#allocation2 + $0x8] sm:$0xff]
    %25 = vst [vmem:[#allocation5] sm:$0xff] %v23
    %26 = vst [vmem:[#allocation5 + $0x8] sm:$0xff] %v24
    // Predicated region
    $region10: #{tpu_custom_call.1} parent=1 // pred_check
      _
    $region11: #{tpu_custom_call.1} parent=1 // pred_check_branch
      %28 = sbr.rel (0) target = $region13
    $region12: #{tpu_custom_call.1} parent=1 // pred_region
      %30 = vsyncadd [#allocation4], 0
      %s32 = sshll.u32 [#allocation5], 4
      %s33 = int_to_ptr.vmem [resolvable:$true] %s32
      %s34 = sshll.u32 %s1, 4
      %s35 = int_to_ptr.hbm [resolvable:$true] %s34
      %37 = dma.vmem_to_hbm [thread:$0]  %s33, 256, %s35, [#allocation4]
    $region13: #{tpu_custom_call.1} parent=1 // pred_fallthru
      _
    // Predicated region
    $region14: #{tpu_custom_call.1} parent=1 // pred_check
      _
    $region15: #{tpu_custom_call.1} parent=1 // pred_check_branch
      %39 = sbr.rel (0) target = $region17
    $region16: #{tpu_custom_call.1} parent=1 // pred_region
      %41 = dma.done [#allocation4], 256
    $region17: #{tpu_custom_call.1} parent=1 // pred_fallthru
      _
    %42 = vsyncpa [#allocation3], 1
    %43 = vsyncpa [#allocation4], 1

</llo_original>
